<compile_context>
chip_gen: v6e
topology: v6e:2x2x1
jax: 0.10.0
libtpu: 0.0.40
codegen_flags: <defaults>
</compile_context>

<pallas_src>
import functools

import jax
import jax.numpy as jnp
from jax.experimental import pallas as pl
from jax.experimental.pallas import tpu as pltpu

LANE = 128  # TPU vreg lane width
SUB = 16    # sublane rounding (bf16-packed safe)


def _round_up(n, m):
    return ((n + m - 1) // m) * m


def default_act_dtype():
    """bf16 elementwise only where the VPU supports it (v6e / v7x)."""
    try:
        kind = jax.devices()[0].device_kind.lower()
    except Exception:
        return jnp.float32
    if any(tag in kind for tag in ("v6", "v7", "7x")):
        return jnp.bfloat16
    return jnp.float32  # v5e and older: keep elementwise in f32


def qnet_kernel(x_ref, w1_ref, b1_ref, w2_ref, b2_ref, w3_ref, b3_ref, o_ref,
                *, act_dtype):
    # One batch tile per grid step; weights/biases are grid-invariant.
    x = x_ref[...]  # already bf16 (streamed from HBM in bf16)

    # fc1 + ReLU   (bf16 MXU inputs; elementwise in act_dtype)
    h = jnp.dot(x, w1_ref[...], preferred_element_type=act_dtype)
    h = jnp.maximum(h + b1_ref[...].astype(act_dtype), 0)
    h = h.astype(jnp.bfloat16)   # no-op when act_dtype == bf16

    # fc2 + ReLU
    h = jnp.dot(h, w2_ref[...], preferred_element_type=act_dtype)
    h = jnp.maximum(h + b2_ref[...].astype(act_dtype), 0)
    h = h.astype(jnp.bfloat16)

    # fc3 + tanh * 2   (f32 accumulate; tanh on the otherwise-idle EUP slot)
    y = jnp.dot(h, w3_ref[...], preferred_element_type=jnp.float32) + b3_ref[...]
    o_ref[...] = (jnp.tanh(y) * 2.0).astype(o_ref.dtype)


def _choose_batch_tile(B, block_batch):
    """Whole batch in one step whenever it fits; otherwise an even number of
    steps so the two v7x TensorCores are load-balanced."""
    if B <= block_batch:
        return max(SUB, _round_up(B, SUB))
    n_steps = pl.cdiv(B, block_batch)
    if n_steps % 2:
        n_steps += 1
    return max(SUB, _round_up(pl.cdiv(B, n_steps), SUB))


def qnetwork_forward(x, padded, *, act_dtype=None, block_batch=2048):
    """x: (B, input_size) float32 (or bf16).  padded: dict from prepare_params()."""
    if act_dtype is None:
        act_dtype = default_act_dtype()

    w1, b1 = padded["w1"], padded["b1"]
    w2, b2 = padded["w2"], padded["b2"]
    w3, b3 = padded["w3"], padded["b3"]
    out_size = padded["out_size"]

    B, in_size = x.shape
    out_pad = w3.shape[1]

    # Stream activations in bf16 (halves the only per-step HBM input stream;
    # ideally x is already produced/stored in bf16 upstream).
    x = x.astype(jnp.bfloat16)

    tb = _choose_batch_tile(B, block_batch)
    grid = (pl.cdiv(B, tb),)  # ragged last block handled by Pallas (masked store)

    def batch_map(i):
        return (i, 0)

    def const_map(i):
        return (0, 0)

    def resident(a):  # full-array block, stays VMEM-resident across steps
        return pl.BlockSpec(a.shape, const_map)

    kernel = functools.partial(qnet_kernel, act_dtype=act_dtype)

    y = pl.pallas_call(
        kernel,
        out_shape=jax.ShapeDtypeStruct((B, out_pad), jnp.bfloat16),
        grid=grid,
        in_specs=[
            pl.BlockSpec((tb, in_size), batch_map),
            resident(w1), resident(b1),
            resident(w2), resident(b2),
            resident(w3), resident(b3),
        ],
        out_specs=pl.BlockSpec((tb, out_pad), batch_map),
        compiler_params=pltpu.CompilerParams(
            dimension_semantics=("parallel",)),
    )(x, w1, b1, w2, b2, w3, b3)

    # Padded output lanes are exactly tanh(0)*2 == 0 (zero-padded w3/b3), so
    # slicing the first out_size lanes recovers the logical result.
    return y[:, :out_size].astype(jnp.float32)


def init_params(key, input_size, hidden_size, output_size):
    """Logical (unpadded, f32) params mimicking nn.Linear init
    (uniform +-1/sqrt(fan_in)).  Weights stored as (in_features, out_features)."""
    def linear(k, fan_in, fan_out):
        kw, kb = jax.random.split(k)
        bound = 1.0 / jnp.sqrt(float(fan_in))
        w = jax.random.uniform(kw, (fan_in, fan_out), jnp.float32, -bound, bound)
        b = jax.random.uniform(kb, (1, fan_out), jnp.float32, -bound, bound)
        return w, b

    k1, k2, knew, k3 = jax.random.split(key, 4)
    w1, b1 = linear(k1, input_size, hidden_size)
    w2, b2 = linear(k2, hidden_size, hidden_size)
    w_new, b_new = linear(knew, hidden_size, hidden_size)  # unused in forward (matches PyTorch)
    w3, b3 = linear(k3, hidden_size, output_size)
    return {"w1": w1, "b1": b1, "w2": w2, "b2": b2,
            "w_new": w_new, "b_new": b_new, "w3": w3, "b3": b3,
            "hidden_size": hidden_size, "output_size": output_size}


def prepare_params(params):
    """One-off host-side prep: zero-pad hidden/output dims to 128 lanes and
    cast weights to bf16 (biases stay f32).  INVARIANT: padded rows/cols of
    w2/w3 and padded bias lanes must stay exactly zero; re-run this after any
    weight update, otherwise garbage leaks into the padded lanes."""
    h = params["hidden_size"]
    o = params["output_size"]
    hp = _round_up(h, LANE)
    op = _round_up(o, LANE)

    def pad_w(w, in_pad, out_pad):
        in_dim, out_dim = w.shape
        return jnp.pad(w, ((0, in_pad - in_dim),
                           (0, out_pad - out_dim))).astype(jnp.bfloat16)

    def pad_b(b, out_pad):
        return jnp.pad(b, ((0, 0), (0, out_pad - b.shape[1]))).astype(jnp.float32)

    in_size = params["w1"].shape[0]
    return {
        "w1": pad_w(params["w1"], in_size, hp),   # (in, hp)  bf16
        "b1": pad_b(params["b1"], hp),            # (1, hp)   f32
        "w2": pad_w(params["w2"], hp, hp),        # (hp, hp)  bf16
        "b2": pad_b(params["b2"], hp),            # (1, hp)   f32
        "w3": pad_w(params["w3"], hp, op),        # (hp, op)  bf16
        "b3": pad_b(params["b3"], op),            # (1, op)   f32
        "out_size": o,
    }


def ref_forward_f32(x, p):
    """Pure-f32 reference of the original PyTorch forward."""
    h = jnp.maximum(x @ p["w1"] + p["b1"], 0.0)
    h = jnp.maximum(h @ p["w2"] + p["b2"], 0.0)
    return jnp.tanh(h @ p["w3"] + p["b3"]) * 2.0


def ref_forward_kernel_math(x, p, act_dtype):
    """Reference mirroring the kernel's bf16-dot / act_dtype-elementwise /
    bf16-output math, on the logical (unpadded) params."""
    def dot(a, w, out_dtype):
        return jnp.dot(a.astype(jnp.bfloat16), w.astype(jnp.bfloat16),
                       preferred_element_type=out_dtype)
    h = jnp.maximum(dot(x, p["w1"], act_dtype) + p["b1"].astype(act_dtype), 0)
    h = jnp.maximum(dot(h, p["w2"], act_dtype) + p["b2"].astype(act_dtype), 0)
    y = dot(h, p["w3"], jnp.float32) + p["b3"]
    return (jnp.tanh(y) * 2.0).astype(jnp.bfloat16).astype(jnp.float32)


if __name__ == "__main__":
    input_size, hidden_size, output_size = 4, 32, 3
    batch = 2

    key = jax.random.PRNGKey(0)
    kx, kp, kx2 = jax.random.split(key, 3)
    x = jax.random.normal(kx, (batch, input_size), jnp.float32)
    params = init_params(kp, input_size, hidden_size, output_size)
    padded = prepare_params(params)
    act_dtype = default_act_dtype()

    # Small-shape run (matches the original DQN usage): single grid step.
    out = jax.block_until_ready(qnetwork_forward(x, padded, act_dtype=act_dtype))
    assert out.shape == (batch, output_size)
    assert out.dtype == jnp.float32
    assert jnp.allclose(out, ref_forward_kernel_math(x, params, act_dtype),
                        atol=1e-2, rtol=1e-2)
    assert jnp.allclose(out, ref_forward_f32(x, params), atol=5e-2, rtol=5e-2)

    # Larger, non-multiple batch exercising the multi-step even-length
    # parallel grid, resident weights, and the ragged (masked) last block.
    x_big = jax.random.normal(kx2, (300, input_size), jnp.float32)
    out_big = jax.block_until_ready(
        qnetwork_forward(x_big, padded, act_dtype=act_dtype, block_batch=128))
    assert out_big.shape == (300, output_size)
    assert jnp.allclose(out_big, ref_forward_kernel_math(x_big, params, act_dtype),
                        atol=1e-2, rtol=1e-2)
    assert jnp.allclose(out_big, ref_forward_f32(x_big, params),
                        atol=5e-2, rtol=5e-2)

    print("KERNEL_OK")
</pallas_src>

<mosaic_0001>
module attributes {stable_mosaic.version = 11 : i64} {
  func.func @qnet_kernel(%arg0: i32, %arg1: memref<16x4xbf16, #tpu.memory_space<vmem>>, %arg2: memref<4x128xbf16, #tpu.memory_space<vmem>>, %arg3: memref<1x128xf32, #tpu.memory_space<vmem>>, %arg4: memref<128x128xbf16, #tpu.memory_space<vmem>>, %arg5: memref<1x128xf32, #tpu.memory_space<vmem>>, %arg6: memref<128x128xbf16, #tpu.memory_space<vmem>>, %arg7: memref<1x128xf32, #tpu.memory_space<vmem>>, %arg8: memref<16x128xbf16, #tpu.memory_space<vmem>>) attributes {dimension_semantics = [#tpu.dimension_semantics<parallel>], iteration_bounds = array<i64: 1>, scalar_prefetch = 0 : i64, scratch_operands = 0 : i64, tpu.core_type = #tpu.core_type<tc>, window_params = [{transform_indices = @transform_0, window_bounds = array<i64: 16, 4>}, {pipeline_mode = #tpu.pipeline_mode<synchronous>, transform_indices = @transform_1, window_bounds = array<i64: 4, 128>}, {pipeline_mode = #tpu.pipeline_mode<synchronous>, transform_indices = @transform_2, window_bounds = array<i64: 1, 128>}, {pipeline_mode = #tpu.pipeline_mode<synchronous>, transform_indices = @transform_3, window_bounds = array<i64: 128, 128>}, {pipeline_mode = #tpu.pipeline_mode<synchronous>, transform_indices = @transform_4, window_bounds = array<i64: 1, 128>}, {pipeline_mode = #tpu.pipeline_mode<synchronous>, transform_indices = @transform_5, window_bounds = array<i64: 128, 128>}, {pipeline_mode = #tpu.pipeline_mode<synchronous>, transform_indices = @transform_6, window_bounds = array<i64: 1, 128>}, {transform_indices = @transform_7, window_bounds = array<i64: 16, 128>}]} {
    %c0 = arith.constant 0 : index
    %c0_0 = arith.constant 0 : index
    %0 = vector.load %arg1[%c0, %c0_0] : memref<16x4xbf16, #tpu.memory_space<vmem>>, vector<16x4xbf16>
    %c0_1 = arith.constant 0 : index
    %c0_2 = arith.constant 0 : index
    %1 = vector.load %arg2[%c0_1, %c0_2] : memref<4x128xbf16, #tpu.memory_space<vmem>>, vector<4x128xbf16>
    %cst = arith.constant dense<0.000000e+00> : vector<16x128xf32>
    %2 = tpu.matmul %0, %1, %cst {dimension_numbers = #tpu.dot_dimension_numbers<[1], [0], [0], [1], [0, 0, 1, 1], [], []>} : vector<16x4xbf16>, vector<4x128xbf16>, vector<16x128xf32> -> vector<16x128xf32>
    %c0_3 = arith.constant 0 : index
    %c0_4 = arith.constant 0 : index
    %3 = vector.load %arg3[%c0_3, %c0_4] : memref<1x128xf32, #tpu.memory_space<vmem>>, vector<1x128xf32>
    %4 = vector.broadcast %3 : vector<1x128xf32> to vector<16x128xf32>
    %5 = arith.addf %2, %4 : vector<16x128xf32>
    %cst_5 = arith.constant 0.000000e+00 : f32
    %6 = vector.broadcast %cst_5 : f32 to vector<16x128xf32>
    %7 = arith.maximumf %5, %6 : vector<16x128xf32>
    %8 = arith.truncf %7 : vector<16x128xf32> to vector<16x128xbf16>
    %c0_6 = arith.constant 0 : index
    %c0_7 = arith.constant 0 : index
    %9 = vector.load %arg4[%c0_6, %c0_7] : memref<128x128xbf16, #tpu.memory_space<vmem>>, vector<128x128xbf16>
    %cst_8 = arith.constant dense<0.000000e+00> : vector<16x128xf32>
    %10 = tpu.matmul %8, %9, %cst_8 {dimension_numbers = #tpu.dot_dimension_numbers<[1], [0], [0], [1], [0, 0, 1, 1], [], []>} : vector<16x128xbf16>, vector<128x128xbf16>, vector<16x128xf32> -> vector<16x128xf32>
    %c0_9 = arith.constant 0 : index
    %c0_10 = arith.constant 0 : index
    %11 = vector.load %arg5[%c0_9, %c0_10] : memref<1x128xf32, #tpu.memory_space<vmem>>, vector<1x128xf32>
    %12 = vector.broadcast %11 : vector<1x128xf32> to vector<16x128xf32>
    %13 = arith.addf %10, %12 : vector<16x128xf32>
    %cst_11 = arith.constant 0.000000e+00 : f32
    %14 = vector.broadcast %cst_11 : f32 to vector<16x128xf32>
    %15 = arith.maximumf %13, %14 : vector<16x128xf32>
    %16 = arith.truncf %15 : vector<16x128xf32> to vector<16x128xbf16>
    %c0_12 = arith.constant 0 : index
    %c0_13 = arith.constant 0 : index
    %17 = vector.load %arg6[%c0_12, %c0_13] : memref<128x128xbf16, #tpu.memory_space<vmem>>, vector<128x128xbf16>
    %cst_14 = arith.constant dense<0.000000e+00> : vector<16x128xf32>
    %18 = tpu.matmul %16, %17, %cst_14 {dimension_numbers = #tpu.dot_dimension_numbers<[1], [0], [0], [1], [0, 0, 1, 1], [], []>} : vector<16x128xbf16>, vector<128x128xbf16>, vector<16x128xf32> -> vector<16x128xf32>
    %c0_15 = arith.constant 0 : index
    %c0_16 = arith.constant 0 : index
    %19 = vector.load %arg7[%c0_15, %c0_16] : memref<1x128xf32, #tpu.memory_space<vmem>>, vector<1x128xf32>
    %20 = vector.broadcast %19 : vector<1x128xf32> to vector<16x128xf32>
    %21 = arith.addf %18, %20 : vector<16x128xf32>
    %22 = math.tanh %21 : vector<16x128xf32>
    %cst_17 = arith.constant 2.000000e+00 : f32
    %23 = vector.broadcast %cst_17 : f32 to vector<16x128xf32>
    %24 = arith.mulf %22, %23 : vector<16x128xf32>
    %25 = arith.truncf %24 : vector<16x128xf32> to vector<16x128xbf16>
    %c0_18 = arith.constant 0 : index
    %c0_19 = arith.constant 0 : index
    %26 = vector.load %arg8[%c0_18, %c0_19] : memref<16x128xbf16, #tpu.memory_space<vmem>>, vector<16x128xbf16>
    tpu.vector_store %arg8[%c0_18, %c0_19], %25 {strides = array<i32>} : memref<16x128xbf16, #tpu.memory_space<vmem>>, vector<16x128xbf16>,
    return
  }
  func.func @transform_0(%arg0: i32) -> (i32, i32) {
    %c0_i32 = arith.constant 0 : i32
    %c0_i32_0 = arith.constant 0 : i32
    return %arg0, %c0_i32 : i32, i32
  }
  func.func @transform_1(%arg0: i32) -> (i32, i32) {
    %c0_i32 = arith.constant 0 : i32
    %c0_i32_0 = arith.constant 0 : i32
    %c0_i32_1 = arith.constant 0 : i32
    return %c0_i32, %c0_i32_0 : i32, i32
  }
  func.func @transform_2(%arg0: i32) -> (i32, i32) {
    %c0_i32 = arith.constant 0 : i32
    %c0_i32_0 = arith.constant 0 : i32
    %c0_i32_1 = arith.constant 0 : i32
    return %c0_i32, %c0_i32_0 : i32, i32
  }
  func.func @transform_3(%arg0: i32) -> (i32, i32) {
    %c0_i32 = arith.constant 0 : i32
    %c0_i32_0 = arith.constant 0 : i32
    %c0_i32_1 = arith.constant 0 : i32
    return %c0_i32, %c0_i32_0 : i32, i32
  }
  func.func @transform_4(%arg0: i32) -> (i32, i32) {
    %c0_i32 = arith.constant 0 : i32
    %c0_i32_0 = arith.constant 0 : i32
    %c0_i32_1 = arith.constant 0 : i32
    return %c0_i32, %c0_i32_0 : i32, i32
  }
  func.func @transform_5(%arg0: i32) -> (i32, i32) {
    %c0_i32 = arith.constant 0 : i32
    %c0_i32_0 = arith.constant 0 : i32
    %c0_i32_1 = arith.constant 0 : i32
    return %c0_i32, %c0_i32_0 : i32, i32
  }
  func.func @transform_6(%arg0: i32) -> (i32, i32) {
    %c0_i32 = arith.constant 0 : i32
    %c0_i32_0 = arith.constant 0 : i32
    %c0_i32_1 = arith.constant 0 : i32
    return %c0_i32, %c0_i32_0 : i32, i32
  }
  func.func @transform_7(%arg0: i32) -> (i32, i32) {
    %c0_i32 = arith.constant 0 : i32
    %c0_i32_0 = arith.constant 0 : i32
    return %arg0, %c0_i32 : i32, i32
  }
}

</mosaic_0001>

<llo_original>
// kernel: tpu_custom_call.1
$region0: #{tpu_custom_call.1}
  #allocation0 [shape = 'u32[]', space=smem, size = 0x4, offset = 0x4, fixed_abs, tag = 'smem constant byte address 0x4 - core index']
  #allocation1 [shape = 'u32[144,128]{1,0:T(1,128)}', space=vmem, size = 0x12000, scoped, tag = 'internal scratch']
  %s0 = inlined_call_operand.hbm [shape: bf16[2,4], index: 0, kind: input, shape index: {}]
  %s1 = inlined_call_operand.hbm [shape: bf16[4,128], index: 1, kind: input, shape index: {}]
  %s2 = inlined_call_operand.vmem [shape: f32[1,128], index: 2, kind: input, shape index: {}]
  %s3 = inlined_call_operand.hbm [shape: bf16[128,128], index: 3, kind: input, shape index: {}]
  %s4 = inlined_call_operand.vmem [shape: f32[1,128], index: 4, kind: input, shape index: {}]
  %s5 = inlined_call_operand.hbm [shape: bf16[128,128], index: 5, kind: input, shape index: {}]
  %s6 = inlined_call_operand.vmem [shape: f32[1,128], index: 6, kind: input, shape index: {}]
  %s7 = inlined_call_operand.hbm [shape: bf16[2,128], index: 7, kind: output, shape index: {}]
  %s8 = sld [smem:[#allocation0]]
  $region54: #{tpu_custom_call.1} parent=0
    _
  %s10 = ssub.s32 1, %s8
  %s11 = scalar_select 0, %s10, %s8
  $region1: #{tpu_custom_call.1} parent=0
    #allocation2 [shape = 'u8[4096]{0}', space=vmem, size = 0x1000, scoped, tag = 'input window, operand 0, single buffered']
    #allocation3 [shape = 's32[1]{0}', space=sflag, size = 0x4, scoped, tag = 'scoped memory for tpu_custom_call.1']
    #allocation4 [shape = 's32[1]{0}', space=sflag, size = 0x4, scoped, tag = 'scoped memory for tpu_custom_call.1']
    #allocation5 [shape = 'u8[1024]{0}', space=vmem, size = 0x400, scoped, tag = 'input window, operand 1, single buffered']
    #allocation6 [shape = 's32[1]{0}', space=sflag, size = 0x4, scoped, tag = 'scoped memory for tpu_custom_call.1']
    #allocation7 [shape = 'u8[32768]{0}', space=vmem, size = 0x8000, scoped, tag = 'input window, operand 3, single buffered']
    #allocation8 [shape = 'u8[32768]{0}', space=vmem, size = 0x8000, scoped, tag = 'input window, operand 5, single buffered']
    #allocation9 [shape = 's32[1]{0}', space=sflag, size = 0x4, scoped, tag = 'scoped memory for tpu_custom_call.1']
    #allocation10 [shape = 'u8[4096]{0}', space=vmem, size = 0x1000, scoped, tag = 'output window, operand 0, single buffered']
    %12 = vsyncpa [#allocation3], 0
    %13 = vsyncpa [#allocation6], 0
    %14 = vsyncpa [#allocation9], 0
    %15 = vsyncpa [#allocation4], 0
    // Predicated region
    $region2: #{tpu_custom_call.1} parent=1 // pred_check
      _
    $region3: #{tpu_custom_call.1} parent=1 // pred_check_branch
      %17 = sbr.rel (0) target = $region5
    $region4: #{tpu_custom_call.1} parent=1 // pred_region
      %s19 = ssub.s32 128, 16
      %20 = vsyncadd [#allocation3], %s19
      %s21 = sshll.u32 [#allocation2], 4
      %s22 = int_to_ptr.vmem [resolvable:$true] %s21
      %27 = dma.hbm_to_vmem [thread:$0]  %s0, 16, %s22, [#allocation3], 16, 16, 1
    $region5: #{tpu_custom_call.1} parent=1 // pred_fallthru
      _
    // Predicated region
    $region6: #{tpu_custom_call.1} parent=1 // pred_check
      _
    $region7: #{tpu_custom_call.1} parent=1 // pred_check_branch
      %29 = sbr.rel (0) target = $region9
    $region8: #{tpu_custom_call.1} parent=1 // pred_region
      %s31 = ssub.s32 32, 32
      %32 = vsyncadd [#allocation6], %s31
      %s34 = sshll.u32 [#allocation5], 4
      %s35 = int_to_ptr.vmem [resolvable:$true] %s34
      %37 = dma.hbm_to_vmem [thread:$0]  %s1, 32, %s35, [#allocation6]
    $region9: #{tpu_custom_call.1} parent=1 // pred_fallthru
      _
    // Predicated region
    $region10: #{tpu_custom_call.1} parent=1 // pred_check
      _
    $region11: #{tpu_custom_call.1} parent=1 // pred_check_branch
      %39 = sbr.rel (0) target = $region13
    $region12: #{tpu_custom_call.1} parent=1 // pred_region
      _
    $region13: #{tpu_custom_call.1} parent=1 // pred_fallthru
      _
    // Predicated region
    $region14: #{tpu_custom_call.1} parent=1 // pred_check
      _
    $region15: #{tpu_custom_call.1} parent=1 // pred_check_branch
      %41 = sbr.rel (0) target = $region17
    $region16: #{tpu_custom_call.1} parent=1 // pred_region
      %s43 = ssub.s32 1024, 1024
      %44 = vsyncadd [#allocation6], %s43
      %s45 = sshll.u32 [#allocation7], 4
      %s46 = int_to_ptr.vmem [resolvable:$true] %s45
      %51 = dma.hbm_to_vmem [thread:$0]  %s3, 1024, %s46, [#allocation6], 64, 64, 4
    $region17: #{tpu_custom_call.1} parent=1 // pred_fallthru
      _
    // Predicated region
    $region18: #{tpu_custom_call.1} parent=1 // pred_check
      _
    $region19: #{tpu_custom_call.1} parent=1 // pred_check_branch
      %53 = sbr.rel (0) target = $region21
    $region20: #{tpu_custom_call.1} parent=1 // pred_region
      _
    $region21: #{tpu_custom_call.1} parent=1 // pred_fallthru
      _
    // Predicated region
    $region22: #{tpu_custom_call.1} parent=1 // pred_check
      _
    $region23: #{tpu_custom_call.1} parent=1 // pred_check_branch
      %55 = sbr.rel (0) target = $region25
    $region24: #{tpu_custom_call.1} parent=1 // pred_region
      %s57 = ssub.s32 1024, 1024
      %58 = vsyncadd [#allocation9], %s57
      %s59 = sshll.u32 [#allocation8], 4
      %s60 = int_to_ptr.vmem [resolvable:$true] %s59
      %65 = dma.hbm_to_vmem [thread:$0]  %s5, 1024, %s60, [#allocation9], 64, 64, 4
    $region25: #{tpu_custom_call.1} parent=1 // pred_fallthru
      _
    // Predicated region
    $region26: #{tpu_custom_call.1} parent=1 // pred_check
      _
    $region27: #{tpu_custom_call.1} parent=1 // pred_check_branch
      %67 = sbr.rel (0) target = $region29
    $region28: #{tpu_custom_call.1} parent=1 // pred_region
      _
    $region29: #{tpu_custom_call.1} parent=1 // pred_fallthru
      _
    // Predicated region
    $region30: #{tpu_custom_call.1} parent=1 // pred_check
      _
    $region31: #{tpu_custom_call.1} parent=1 // pred_check_branch
      %69 = sbr.rel (0) target = $region33
    $region32: #{tpu_custom_call.1} parent=1 // pred_region
      %70 = dma.done [#allocation3], 128
    $region33: #{tpu_custom_call.1} parent=1 // pred_fallthru
      _
    // Predicated region
    $region34: #{tpu_custom_call.1} parent=1 // pred_check
      _
    $region35: #{tpu_custom_call.1} parent=1 // pred_check_branch
      %72 = sbr.rel (0) target = $region37
    $region36: #{tpu_custom_call.1} parent=1 // pred_region
      %73 = dma.done [#allocation6], 32
    $region37: #{tpu_custom_call.1} parent=1 // pred_fallthru
      _
    // Predicated region
    $region38: #{tpu_custom_call.1} parent=1 // pred_check
      _
    $region39: #{tpu_custom_call.1} parent=1 // pred_check_branch
      %75 = sbr.rel (0) target = $region41
    $region40: #{tpu_custom_call.1} parent=1 // pred_region
      %76 = dma.done [#allocation6], 1024
    $region41: #{tpu_custom_call.1} parent=1 // pred_fallthru
      _
    // Predicated region
    $region42: #{tpu_custom_call.1} parent=1 // pred_check
      _
    $region43: #{tpu_custom_call.1} parent=1 // pred_check_branch
      %78 = sbr.rel (0) target = $region45
    $region44: #{tpu_custom_call.1} parent=1 // pred_region
      %79 = dma.done [#allocation9], 1024
    $region45: #{tpu_custom_call.1} parent=1 // pred_fallthru
      _
    %v81 = vld [vmem:[#allocation2] sm:$0x1]
    %v82 = vld [vmem:[#allocation2 + $0x1] sm:$0x1]
    %v83 = vld [vmem:[#allocation2 + $0x2] sm:$0x1]
    %v84 = vld [vmem:[#allocation2 + $0x3] sm:$0x1]
    %v85 = vld [vmem:[#allocation2 + $0x4] sm:$0x1]
    %v86 = vld [vmem:[#allocation2 + $0x5] sm:$0x1]
    %v87 = vld [vmem:[#allocation2 + $0x6] sm:$0x1]
    %v88 = vld [vmem:[#allocation2 + $0x7] sm:$0x1]
    %v89 = vld [vmem:[#allocation5] sm:$0x3]
    %v90 = vld [vmem:[%s2] sm:$0x1]
    %v92 = vlaneseq
    %v93 = vshrl.u32 %v92, 7
    %v94 = vsub.s32 0, %v93
    %v95 = vrot.slane %v90, %v94
    %v105 = vcombine.low %v81, %v82
    %v106 = vcombine.low %v83, %v84
    %v107 = vcombine.low %v85, %v86
    %v108 = vcombine.low %v87, %v88
    %v110 = vunpack.c.l.s4 1966171168
    %v111 = vunpack.c.0.s8 %v110
    %v112 = vlaneseq
    %v113 = vshrl.u32 %v112, 7
    %v114 = vsub.s32 %v111, %v113
    %v115 = vrot.slane %v105, %v114
    %v117 = vunpack.c.l.s4 1966171168
    %v118 = vunpack.c.0.s8 %v117
    %v119 = vlaneseq
    %v120 = vshrl.u32 %v119, 7
    %v121 = vsub.s32 %v118, %v120
    %v122 = vrot.slane %v106, %v121
    %v124 = vunpack.c.l.s4 1966171168
    %v125 = vunpack.c.0.s8 %v124
    %v126 = vlaneseq
    %v127 = vshrl.u32 %v126, 7
    %v128 = vsub.s32 %v125, %v127
    %v129 = vrot.slane %v107, %v128
    %v131 = vunpack.c.l.s4 1966171168
    %v132 = vunpack.c.0.s8 %v131
    %v133 = vlaneseq
    %v134 = vshrl.u32 %v133, 7
    %v135 = vsub.s32 %v132, %v134
    %v136 = vrot.slane %v108, %v135
    %v137 = vcombine.low %v115, %v122
    %v138 = vcombine.low %v129, %v136
    %v140 = vunpack.c.l.s4 1966171168
    %v141 = vunpack.c.0.s8 %v140
    %v142 = vlaneseq
    %v143 = vshrl.u32 %v142, 7
    %v144 = vsub.s32 %v141, %v143
    %v145 = vrot.slane %v137, %v144
    %v147 = vunpack.c.l.s4 1966171168
    %v148 = vunpack.c.0.s8 %v147
    %v149 = vlaneseq
    %v150 = vshrl.u32 %v149, 7
    %v151 = vsub.s32 %v148, %v150
    %v152 = vrot.slane %v138, %v151
    %v153 = vcombine.low %v145, %v152
    %vm154 = vcmask 31744
    %v156 = vsel %vm154, %v153, 0
    %vm158 = vcmask 1041408
    %v160 = vsel %vm158, %v89, 0
    %162 = vmatprep.subr.bf16.mxu0 0
    %163 = vmatpush1.bf16.msra.mxu0 0
    %164 = vmatprep.subr.bf16.mxu0 0
    %165 = vmatpush1.bf16.msra.mxu0 0
    %166 = vmatprep.subr.bf16.mxu0 0
    %167 = vmatpush1.bf16.msra.mxu0 0
    %168 = vmatprep.subr.bf16.mxu0 0
    %169 = vmatpush1.bf16.msra.mxu0 0
    %170 = vmatprep.subr.bf16.mxu0 0
    %171 = vmatpush1.bf16.msra.mxu0 0
    %172 = vmatprep.subr.bf16.mxu0 0
    %173 = vmatpush1.bf16.msra.mxu0 0
    %174 = vmatprep.subr.bf16.mxu0 0
    %175 = vmatpush1.bf16.msra.mxu0 0
    %176 = vmatprep.subr.bf16.mxu0 0
    %177 = vmatpush1.bf16.msra.mxu0 %v160
    %178 = vmatprep.subr.bf16.mxu0 0
    %179 = vmatpush2.bf16.msra.mxu0 0
    %180 = vmatprep.subr.bf16.mxu0 0
    %181 = vmatpush2.bf16.msra.mxu0 0
    %182 = vmatprep.subr.bf16.mxu0 0
    %183 = vmatpush2.bf16.msra.mxu0 0
    %184 = vmatprep.subr.bf16.mxu0 0
    %185 = vmatpush2.bf16.msra.mxu0 0
    %186 = vmatprep.subr.bf16.mxu0 0
    %187 = vmatpush2.bf16.msra.mxu0 0
    %188 = vmatprep.subr.bf16.mxu0 0
    %189 = vmatpush2.bf16.msra.mxu0 0
    %190 = vmatprep.subr.bf16.mxu0 0
    %191 = vmatpush2.bf16.msra.mxu0 0
    %192 = vmatprep.subr.bf16.mxu0 0
    %193 = vmatpush2.bf16.msra.mxu0 0
    %194 = vmatprep.mubr.bf16.mxu0 0
    %195 = vmatmul.mubr.bf16.gmra.mxu0 %v156
    %v196 = vpop.f32.mrf.mxu0
    %v197 = vadd.f32 %v95, %v196
    %v198 = vpop.f32.mrf.mxu0
    %v199 = vpop.f32.mrf.mxu0
    %v200 = vadd.f32 %v95, %v199
    %v201 = vpop.f32.mrf.mxu0
    %202 = vdwg.mxu0
    %v203 = vmax.f32 %v197, 0.0
    %v204 = vmax.f32 %v200, 0.0
    %v205 = vpack.c.bf16 %v204, %v203
    %v206 = vld [vmem:[#allocation7] sm:$0xf]
    %v207 = vld [vmem:[#allocation7 + $0x4] sm:$0xf]
    %v208 = vld [vmem:[#allocation7 + $0x8] sm:$0xf]
    %v209 = vld [vmem:[#allocation7 + $0xc] sm:$0xf]
    %v210 = vld [vmem:[#allocation7 + $0x10] sm:$0xf]
    %v211 = vld [vmem:[#allocation7 + $0x14] sm:$0xf]
    %v212 = vld [vmem:[#allocation7 + $0x18] sm:$0xf]
    %v213 = vld [vmem:[#allocation7 + $0x1c] sm:$0xf]
    %v214 = vld [vmem:[#allocation7 + $0x20] sm:$0xf]
    %v215 = vld [vmem:[#allocation7 + $0x24] sm:$0xf]
    %v216 = vld [vmem:[#allocation7 + $0x28] sm:$0xf]
    %v217 = vld [vmem:[#allocation7 + $0x2c] sm:$0xf]
    %v218 = vld [vmem:[#allocation7 + $0x30] sm:$0xf]
    %v219 = vld [vmem:[#allocation7 + $0x34] sm:$0xf]
    %v220 = vld [vmem:[#allocation7 + $0x38] sm:$0xf]
    %v221 = vld [vmem:[#allocation7 + $0x3c] sm:$0xf]
    %v222 = vld [vmem:[%s4] sm:$0x1]
    %v224 = vlaneseq
    %v225 = vshrl.u32 %v224, 7
    %v226 = vsub.s32 0, %v225
    %v227 = vrot.slane %v222, %v226
    %v245 = vunpack.c.l.b16 %v206
    %v246 = vunpack.c.l.b16 %v207
    %v247 = vunpack.c.l.b16 %v208
    %v248 = vunpack.c.l.b16 %v209
    %v249 = vunpack.c.l.b16 %v210
    %v250 = vunpack.c.l.b16 %v211
    %v251 = vunpack.c.l.b16 %v212
    %v252 = vunpack.c.l.b16 %v213
    %v253 = vunpack.c.l.b16 %v214
    %v254 = vunpack.c.l.b16 %v215
    %v255 = vunpack.c.l.b16 %v216
    %v256 = vunpack.c.l.b16 %v217
    %v257 = vunpack.c.l.b16 %v218
    %v258 = vunpack.c.l.b16 %v219
    %v259 = vunpack.c.l.b16 %v220
    %v260 = vunpack.c.l.b16 %v221
    %v261 = vpack.c.b16 %v246, %v245
    %v262 = vpack.c.b16 %v248, %v247
    %v263 = vpack.c.b16 %v250, %v249
    %v264 = vpack.c.b16 %v252, %v251
    %v265 = vpack.c.b16 %v254, %v253
    %v266 = vpack.c.b16 %v256, %v255
    %v267 = vpack.c.b16 %v258, %v257
    %v268 = vpack.c.b16 %v260, %v259
    %277 = vmatprep.subr.bf16.mxu0 0
    %278 = vmatpush1.bf16.msra.mxu0 %v268
    %279 = vmatprep.subr.bf16.mxu0 0
    %280 = vmatpush1.bf16.msra.mxu0 %v267
    %281 = vmatprep.subr.bf16.mxu0 0
    %282 = vmatpush1.bf16.msra.mxu0 %v266
    %283 = vmatprep.subr.bf16.mxu0 0
    %284 = vmatpush1.bf16.msra.mxu0 %v265
    %285 = vmatprep.subr.bf16.mxu0 0
    %286 = vmatpush1.bf16.msra.mxu0 %v264
    %287 = vmatprep.subr.bf16.mxu0 0
    %288 = vmatpush1.bf16.msra.mxu0 %v263
    %289 = vmatprep.subr.bf16.mxu0 0
    %290 = vmatpush1.bf16.msra.mxu0 %v262
    %291 = vmatprep.subr.bf16.mxu0 0
    %292 = vmatpush1.bf16.msra.mxu0 %v261
    %293 = vmatprep.subr.bf16.mxu0 0
    %294 = vmatpush2.bf16.msra.mxu0 0
    %295 = vmatprep.subr.bf16.mxu0 0
    %296 = vmatpush2.bf16.msra.mxu0 0
    %297 = vmatprep.subr.bf16.mxu0 0
    %298 = vmatpush2.bf16.msra.mxu0 0
    %299 = vmatprep.subr.bf16.mxu0 0
    %300 = vmatpush2.bf16.msra.mxu0 0
    %301 = vmatprep.subr.bf16.mxu0 0
    %302 = vmatpush2.bf16.msra.mxu0 0
    %303 = vmatprep.subr.bf16.mxu0 0
    %304 = vmatpush2.bf16.msra.mxu0 0
    %305 = vmatprep.subr.bf16.mxu0 0
    %306 = vmatpush2.bf16.msra.mxu0 0
    %307 = vmatprep.subr.bf16.mxu0 0
    %308 = vmatpush2.bf16.msra.mxu0 0
    %309 = vmatprep.mubr.bf16.mxu0 0
    %310 = vmatmul.mubr.bf16.gmra.mxu0 %v205
    %v311 = vpop.f32.mrf.mxu0
    %v312 = vadd.f32 %v227, %v311
    %v313 = vpop.f32.mrf.mxu0
    %v314 = vpop.f32.mrf.mxu0
    %v315 = vadd.f32 %v227, %v314
    %v316 = vpop.f32.mrf.mxu0
    %317 = vdwg.mxu0
    %v318 = vmax.f32 %v312, 0.0
    %v319 = vmax.f32 %v315, 0.0
    %v320 = vpack.c.bf16 %v319, %v318
    %v321 = vld [vmem:[#allocation8] sm:$0xf]
    %v322 = vld [vmem:[#allocation8 + $0x4] sm:$0xf]
    %v323 = vld [vmem:[#allocation8 + $0x8] sm:$0xf]
    %v324 = vld [vmem:[#allocation8 + $0xc] sm:$0xf]
    %v325 = vld [vmem:[#allocation8 + $0x10] sm:$0xf]
    %v326 = vld [vmem:[#allocation8 + $0x14] sm:$0xf]
    %v327 = vld [vmem:[#allocation8 + $0x18] sm:$0xf]
    %v328 = vld [vmem:[#allocation8 + $0x1c] sm:$0xf]
    %v329 = vld [vmem:[#allocation8 + $0x20] sm:$0xf]
    %v330 = vld [vmem:[#allocation8 + $0x24] sm:$0xf]
    %v331 = vld [vmem:[#allocation8 + $0x28] sm:$0xf]
    %v332 = vld [vmem:[#allocation8 + $0x2c] sm:$0xf]
    %v333 = vld [vmem:[#allocation8 + $0x30] sm:$0xf]
    %v334 = vld [vmem:[#allocation8 + $0x34] sm:$0xf]
    %v335 = vld [vmem:[#allocation8 + $0x38] sm:$0xf]
    %v336 = vld [vmem:[#allocation8 + $0x3c] sm:$0xf]
    %v337 = vld [vmem:[%s6] sm:$0x1]
    %v339 = vlaneseq
    %v340 = vshrl.u32 %v339, 7
    %v341 = vsub.s32 0, %v340
    %v342 = vrot.slane %v337, %v341
    %v360 = vunpack.c.l.b16 %v321
    %v361 = vunpack.c.l.b16 %v322
    %v362 = vunpack.c.l.b16 %v323
    %v363 = vunpack.c.l.b16 %v324
    %v364 = vunpack.c.l.b16 %v325
    %v365 = vunpack.c.l.b16 %v326
    %v366 = vunpack.c.l.b16 %v327
    %v367 = vunpack.c.l.b16 %v328
    %v368 = vunpack.c.l.b16 %v329
    %v369 = vunpack.c.l.b16 %v330
    %v370 = vunpack.c.l.b16 %v331
    %v371 = vunpack.c.l.b16 %v332
    %v372 = vunpack.c.l.b16 %v333
    %v373 = vunpack.c.l.b16 %v334
    %v374 = vunpack.c.l.b16 %v335
    %v375 = vunpack.c.l.b16 %v336
    %v376 = vpack.c.b16 %v361, %v360
    %v377 = vpack.c.b16 %v363, %v362
    %v378 = vpack.c.b16 %v365, %v364
    %v379 = vpack.c.b16 %v367, %v366
    %v380 = vpack.c.b16 %v369, %v368
    %v381 = vpack.c.b16 %v371, %v370
    %v382 = vpack.c.b16 %v373, %v372
    %v383 = vpack.c.b16 %v375, %v374
    %392 = vmatprep.subr.bf16.mxu0 0
    %393 = vmatpush1.bf16.msra.mxu0 %v383
    %394 = vmatprep.subr.bf16.mxu0 0
    %395 = vmatpush1.bf16.msra.mxu0 %v382
    %396 = vmatprep.subr.bf16.mxu0 0
    %397 = vmatpush1.bf16.msra.mxu0 %v381
    %398 = vmatprep.subr.bf16.mxu0 0
    %399 = vmatpush1.bf16.msra.mxu0 %v380
    %400 = vmatprep.subr.bf16.mxu0 0
    %401 = vmatpush1.bf16.msra.mxu0 %v379
    %402 = vmatprep.subr.bf16.mxu0 0
    %403 = vmatpush1.bf16.msra.mxu0 %v378
    %404 = vmatprep.subr.bf16.mxu0 0
    %405 = vmatpush1.bf16.msra.mxu0 %v377
    %406 = vmatprep.subr.bf16.mxu0 0
    %407 = vmatpush1.bf16.msra.mxu0 %v376
    %408 = vmatprep.subr.bf16.mxu0 0
    %409 = vmatpush2.bf16.msra.mxu0 0
    %410 = vmatprep.subr.bf16.mxu0 0
    %411 = vmatpush2.bf16.msra.mxu0 0
    %412 = vmatprep.subr.bf16.mxu0 0
    %413 = vmatpush2.bf16.msra.mxu0 0
    %414 = vmatprep.subr.bf16.mxu0 0
    %415 = vmatpush2.bf16.msra.mxu0 0
    %416 = vmatprep.subr.bf16.mxu0 0
    %417 = vmatpush2.bf16.msra.mxu0 0
    %418 = vmatprep.subr.bf16.mxu0 0
    %419 = vmatpush2.bf16.msra.mxu0 0
    %420 = vmatprep.subr.bf16.mxu0 0
    %421 = vmatpush2.bf16.msra.mxu0 0
    %422 = vmatprep.subr.bf16.mxu0 0
    %423 = vmatpush2.bf16.msra.mxu0 0
    %424 = vmatprep.mubr.bf16.mxu0 0
    %425 = vmatmul.mubr.bf16.gmra.mxu0 %v320
    %v426 = vpop.f32.mrf.mxu0
    %v427 = vadd.f32 %v342, %v426
    %v428 = vpop.f32.mrf.mxu0
    %v429 = vpop.f32.mrf.mxu0
    %v430 = vadd.f32 %v342, %v429
    %v431 = vpop.f32.mrf.mxu0
    %432 = vdwg.mxu0
    %v433 = vtanh.pop %v427
    %v434 = vtanh.pop %v430
    %v435 = vmul.f32 %v433, 2.0
    %v436 = vmul.f32 %v434, 2.0
    %v437 = vpack.c.bf16 %v436, %v435
    %v439 = vcombine.high %v437, %v437
    %v441 = vunpack.c.l.s4 1966171168
    %v442 = vunpack.c.0.s8 %v441
    %v443 = vlaneseq
    %v444 = vshrl.u32 %v443, 7
    %v445 = vsub.s32 %v442, %v444
    %v446 = vrot.slane %v437, %v445
    %v448 = vunpack.c.l.s4 1966171168
    %v449 = vunpack.c.0.s8 %v448
    %v450 = vlaneseq
    %v451 = vshrl.u32 %v450, 7
    %v452 = vsub.s32 %v449, %v451
    %v453 = vrot.slane %v439, %v452
    %v454 = vcombine.high %v446, %v446
    %v455 = vcombine.high %v453, %v453
    %v457 = vunpack.c.l.s4 1966171168
    %v458 = vunpack.c.0.s8 %v457
    %v459 = vlaneseq
    %v460 = vshrl.u32 %v459, 7
    %v461 = vsub.s32 %v458, %v460
    %v462 = vrot.slane %v446, %v461
    %v464 = vunpack.c.l.s4 1966171168
    %v465 = vunpack.c.0.s8 %v464
    %v466 = vlaneseq
    %v467 = vshrl.u32 %v466, 7
    %v468 = vsub.s32 %v465, %v467
    %v469 = vrot.slane %v453, %v468
    %v471 = vunpack.c.l.s4 1966171168
    %v472 = vunpack.c.0.s8 %v471
    %v473 = vlaneseq
    %v474 = vshrl.u32 %v473, 7
    %v475 = vsub.s32 %v472, %v474
    %v476 = vrot.slane %v454, %v475
    %v478 = vunpack.c.l.s4 1966171168
    %v479 = vunpack.c.0.s8 %v478
    %v480 = vlaneseq
    %v481 = vshrl.u32 %v480, 7
    %v482 = vsub.s32 %v479, %v481
    %v483 = vrot.slane %v455, %v482
    %v484 = vcombine.high %v462, %v462
    %v485 = vcombine.high %v469, %v469
    %v486 = vcombine.high %v476, %v476
    %v487 = vcombine.high %v483, %v483
    %496 = vst [vmem:[#allocation10] sm:$0x1] %v462
    %497 = vst [vmem:[#allocation10 + $0x1] sm:$0x1] %v476
    %498 = vst [vmem:[#allocation10 + $0x2] sm:$0x1] %v484
    %499 = vst [vmem:[#allocation10 + $0x3] sm:$0x1] %v486
    %500 = vst [vmem:[#allocation10 + $0x4] sm:$0x1] %v469
    %501 = vst [vmem:[#allocation10 + $0x5] sm:$0x1] %v483
    %502 = vst [vmem:[#allocation10 + $0x6] sm:$0x1] %v485
    %503 = vst [vmem:[#allocation10 + $0x7] sm:$0x1] %v487
    // Predicated region
    $region46: #{tpu_custom_call.1} parent=1 // pred_check
      _
    $region47: #{tpu_custom_call.1} parent=1 // pred_check_branch
      %505 = sbr.rel (0) target = $region49
    $region48: #{tpu_custom_call.1} parent=1 // pred_region
      %s507 = ssub.s32 128, 16
      %508 = vsyncadd [#allocation4], %s507
      %s509 = sshll.u32 [#allocation10], 4
      %s510 = int_to_ptr.vmem [resolvable:$true] %s509
      %515 = dma.vmem_to_hbm [thread:$0]  %s510, 16, %s7, [#allocation4], 16, 16, 1
    $region49: #{tpu_custom_call.1} parent=1 // pred_fallthru
      _
    // Predicated region
    $region50: #{tpu_custom_call.1} parent=1 // pred_check
      _
    $region51: #{tpu_custom_call.1} parent=1 // pred_check_branch
      %517 = sbr.rel (0) target = $region53
    $region52: #{tpu_custom_call.1} parent=1 // pred_region
      %518 = dma.done [#allocation4], 128
    $region53: #{tpu_custom_call.1} parent=1 // pred_fallthru
      _
    %519 = vsyncpa [#allocation3], 1
    %520 = vsyncpa [#allocation6], 1
    %521 = vsyncpa [#allocation9], 1
    %522 = vsyncpa [#allocation4], 1

</llo_original>
